<compile_context>
chip_gen: v7x
topology: tpu7x:2x2x1
jax: 0.10.0
libtpu: 0.0.40
codegen_flags: <defaults>
</compile_context>

<pallas_src>
import jax
import jax.numpy as jnp
from jax.experimental import pallas as pl
from jax.experimental.pallas import tpu as pltpu


def _round_up(x, m):
    return (x + m - 1) // m * m


# ---------------------------------------------------------------------------
# Generation-aware tiling (explicit VMEM budget instead of a fixed tile cap).
# ---------------------------------------------------------------------------

def _tpu_generation():
    try:
        kind = jax.devices()[0].device_kind.lower()
    except Exception:
        return "unknown"
    if "v5" in kind:
        return "v5e"
    if "v6" in kind or "trillium" in kind:
        return "v6e"
    if "v7" in kind or "7x" in kind:
        return "v7x"
    return "unknown"


_GEN_CONFIG = {
    # budget_bytes: VMEM spent on the kernel's buffers (weight/bias/output
    #   double buffers + resident features); stays under the default scoped
    #   limits (16 MiB v5e, 32 MiB v6e/v7x).
    # min_steps: minimum grid steps so dimension_semantics=("parallel",) can
    #   actually shard the class axis across both v7x TensorCores.
    "v5e":     dict(budget_bytes=10 * 2**20, min_steps=1),
    "v6e":     dict(budget_bytes=24 * 2**20, min_steps=1),
    "v7x":     dict(budget_bytes=24 * 2**20, min_steps=2),
    "unknown": dict(budget_bytes=12 * 2**20, min_steps=2),
}


def _footprint_bytes(tile_c, D, b_rows, n_weight_bufs):
    return (n_weight_bufs * D * tile_c * 2      # streamed weight.T tiles (bf16)
            + 2 * tile_c * 4                    # streamed bias tiles (f32)
            + 2 * b_rows * tile_c * 4           # output tiles (f32)
            + 2 * b_rows * D * 2)               # resident features (bf16), x2 safety


def _select_tiling(C, D, b_rows, budget_bytes, min_steps):
    """Largest lane-dense tile_c that (a) evenly divides the 128-padded class
    dim (no wasted padded-column HBM traffic), (b) fits the VMEM budget when
    double-buffered, (c) leaves >= min_steps grid steps when possible."""
    c_pad = _round_up(max(C, 1), 128)
    n_lanes = c_pad // 128
    want_steps = min(min_steps, n_lanes)
    tile_c = 128  # fallback even if the budget check fails (limit raised below)
    for g in range(1, n_lanes + 1):
        if n_lanes % g:
            continue
        tile = g * 128
        steps = c_pad // tile
        if steps < want_steps:
            break
        if _footprint_bytes(tile, D, b_rows, 2) <= budget_bytes:
            tile_c = tile
    steps = c_pad // tile_c
    # Deeper weight buffering only when tiles are forced small (per-step DMA is
    # short vs. the ~0.35 us fixed step cost) and it still fits the budget.
    use_buf3 = (tile_c <= 256 and steps >= 4
                and _footprint_bytes(tile_c, D, b_rows, 3) <= budget_bytes)
    foot = _footprint_bytes(tile_c, D, b_rows, 3 if use_buf3 else 2)
    vmem_limit = int(min(48 * 2**20, max(32 * 2**20, foot + 8 * 2**20)))
    return tile_c, c_pad, use_buf3, vmem_limit


# ---------------------------------------------------------------------------
# One-time (init) parameter preparation — hoisted out of the per-call path.
# ---------------------------------------------------------------------------

def prepare_cam_params(weight, bias, *, batch_hint=128):
    """Cacheable transform of the classifier params for the Pallas hot path.

    Stores weight.T as a lane-padded bf16 (D, c_pad) array plus a padded f32
    bias row, so each forward call only streams C*D*2 bytes of HBM instead of
    re-reading the f32 weight and re-writing a bf16 copy every call.
    """
    C, D = weight.shape
    cfg = _GEN_CONFIG.get(_tpu_generation(), _GEN_CONFIG["unknown"])
    b_rows = _round_up(max(int(batch_hint), 1), 8)
    tile_c, c_pad, use_buf3, vmem_limit = _select_tiling(
        C, D, b_rows, cfg["budget_bytes"], cfg["min_steps"])
    wt = jnp.pad(weight.T.astype(jnp.bfloat16), ((0, 0), (0, c_pad - C)))
    b_pad = jnp.pad(bias.astype(jnp.float32), (0, c_pad - C)).reshape(1, c_pad)
    return dict(wt=wt, bias=b_pad, tile_c=tile_c, c_pad=c_pad, C=C, D=D,
                use_buf3=use_buf3, vmem_limit=vmem_limit)


# ---------------------------------------------------------------------------
# Pallas kernel: single dot + bias add per class tile (weight-stream bound).
# ---------------------------------------------------------------------------

def _cam_linear_kernel(x_ref, wt_ref, b_ref, o_ref):
    # (B_pad, D) @ (D, tile_c) on the MXU with f32 accumulation, bias on the VPU.
    acc = jnp.dot(x_ref[...], wt_ref[...], preferred_element_type=jnp.float32)
    o_ref[...] = (acc + b_ref[...]).astype(o_ref.dtype)


def _plain_linear_all_classes(features, prepared):
    """(B, c_pad) f32 = features @ weight.T + bias for ALL classes (no mask)."""
    wt, b_pad = prepared["wt"], prepared["bias"]
    tile_c, c_pad, D = prepared["tile_c"], prepared["c_pad"], prepared["D"]
    B = features.shape[0]
    B_pad = _round_up(B, 8)  # sublane-dense rows -> unmasked stores on the output tile
    x = features.astype(jnp.bfloat16)
    if B_pad != B:
        x = jnp.pad(x, ((0, B_pad - B), (0, 0)))

    w_spec_kwargs = {}
    if prepared["use_buf3"]:
        w_spec_kwargs["pipeline_mode"] = pl.Buffered(3)

    out = pl.pallas_call(
        _cam_linear_kernel,
        out_shape=jax.ShapeDtypeStruct((B_pad, c_pad), jnp.float32),
        grid=(c_pad // tile_c,),
        in_specs=[
            pl.BlockSpec((B_pad, D), lambda j: (0, 0)),                     # features (resident)
            pl.BlockSpec((D, tile_c), lambda j: (0, j), **w_spec_kwargs),   # weight.T (streamed)
            pl.BlockSpec((1, tile_c), lambda j: (0, j)),                    # bias     (streamed)
        ],
        out_specs=pl.BlockSpec((B_pad, tile_c), lambda j: (0, j)),
        compiler_params=pltpu.CompilerParams(
            # class tiles are independent -> shard across TensorCores (v7x)
            dimension_semantics=("parallel",),
            vmem_limit_bytes=prepared["vmem_limit"]),
    )(x, wt, b_pad)
    return out[:B]


# ---------------------------------------------------------------------------
# Dropout glue + forward.
# ---------------------------------------------------------------------------

def _discriminative_dropout_idx(output, weight, p, key):
    """Plain-JAX glue (softmax / sort / top-k / Bernoulli): no clean Pallas op."""
    B = output.shape[0]
    D = weight.shape[1]
    h_x = jax.nn.softmax(output, axis=1)                   # (B, C)
    # torch: h_x.sort(0, True)[1][:, 0].  NOTE: tie ordering may differ from torch.
    idx0 = jnp.argsort(-h_x[:, 0])                         # (B,), permutation of [0, B)
    cam_weight = weight[idx0]                              # (B, D)
    k = round(D * 0.5)                                     # same Python round as the module
    _, topk_idx = jax.lax.top_k(cam_weight, k)             # (B, k)
    # F.dropout on an all-ones block: 0 w.p. p, else 1/(1-p).  Guard p == 1.
    if p >= 1.0:
        drop_vals = jnp.zeros((B, k), jnp.float32)
    else:
        keep = jax.random.bernoulli(key, 1.0 - p, (B, k)).astype(jnp.float32)
        drop_vals = keep / (1.0 - p)
    return idx0, topk_idx, drop_vals


def cam_dropout_forward(features, output, weight, bias, p, key,
                        training=True, prepared=None):
    """JAX port of CAMDropout.forward (training branch runs the Pallas hot path)."""
    if not training:
        return output

    B, D = features.shape
    C = weight.shape[0]
    assert B <= C, "module semantics require batch <= num_classes"

    if prepared is None:
        # NOTE: in a real model call prepare_cam_params ONCE at init and reuse it;
        # rebuilding here re-reads/re-writes the full weight and wastes HBM BW.
        prepared = prepare_cam_params(weight, bias, batch_hint=B)

    idx0, topk_idx, drop_vals = _discriminative_dropout_idx(output, weight, p, key)

    # TODO(synk): original module prints torch.mean(weight[idx, topk_idx], dim=1).size();
    # omitted so the only stdout is KERNEL_OK.

    # Compact (B, D) mask for the selected rows only — no dense (C, D) mask.
    row_mask = jnp.ones((B, D), jnp.float32).at[
        jnp.arange(B)[:, None], topk_idx].set(drop_vals)
    # Class idx0[b] gets row_mask[b]; idx0 is a permutation of [0, B), so only
    # the first B weight rows are masked and only the first B biases zeroed.
    class_mask = jnp.zeros((B, D), jnp.float32).at[idx0].set(row_mask)
    masked_first_rows = weight[:B] * class_mask            # (B, D) f32

    # Hot path: stream the cached bf16 weight.T once through the Pallas kernel.
    plain = _plain_linear_all_classes(features, prepared)  # (B, c_pad) f32

    # Tiny f32 fix-up for the B dropout-masked classes (their bias is zero):
    # a (B, D) x (D, B) matmul — negligible next to the weight stream and kept
    # in f32 so the masked columns retain full precision.
    fix = features @ masked_first_rows.T                   # (B, B) f32

    res = plain[:, :C].at[:, :B].set(fix)
    return res


if __name__ == "__main__":
    B, C, D = 4, 512, 256  # batch, classes, feature dim (B <= C as the module requires)
    drop_rate = 0.5

    key = jax.random.PRNGKey(0)
    k_w, k_b, k_x, k_drop = jax.random.split(key, 4)

    # deterministic synthetic "final linear layer" parameters (CAM weights)
    weight = 0.05 * jax.random.normal(k_w, (C, D), jnp.float32)
    bias = 0.05 * jax.random.normal(k_b, (C,), jnp.float32)

    # inputs: pooled features and the corresponding classifier logits
    features = jax.random.normal(k_x, (B, D), jnp.float32)
    output = features @ weight.T + bias  # (B, C) logits

    # One-time (init) weight transform — hoisted out of the per-call path.
    prepared = prepare_cam_params(weight, bias, batch_hint=B)

    res = cam_dropout_forward(features, output, weight, bias,
                              p=drop_rate, key=k_drop, training=True,
                              prepared=prepared)
    res = jax.block_until_ready(res)
    assert res.shape == (B, C) and res.dtype == jnp.float32

    # Validate against the dense-mask f32 formula from the torch module
    # (same idx/top-k/dropout draw), loose tolerance for the bf16 MXU path.
    idx0, topk_idx, drop_vals = _discriminative_dropout_idx(
        output, weight, drop_rate, k_drop)
    mask = jnp.ones((C, D), jnp.float32).at[idx0[:, None], topk_idx].set(drop_vals)
    mask_b = jnp.ones((C,), jnp.float32).at[idx0].set(0.0)
    ref = features @ (weight * mask).T + bias * mask_b
    assert float(jnp.max(jnp.abs(res - ref))) < 5e-2, "mismatch vs dense-mask reference"

    # eval-mode path (identity on `output`)
    res_eval = cam_dropout_forward(features, output, weight, bias,
                                   p=drop_rate, key=k_drop, training=False,
                                   prepared=prepared)
    jax.block_until_ready(res_eval)

    print("KERNEL_OK")
</pallas_src>

<mosaic_0001>
module attributes {stable_mosaic.version = 11 : i64} {
  func.func @_cam_linear_kernel(%arg0: i32, %arg1: memref<8x256xbf16, #tpu.memory_space<vmem>>, %arg2: memref<256x256xbf16, #tpu.memory_space<vmem>>, %arg3: memref<1x256xf32, #tpu.memory_space<vmem>>, %arg4: memref<8x256xf32, #tpu.memory_space<vmem>>) attributes {dimension_semantics = [#tpu.dimension_semantics<parallel>], iteration_bounds = array<i64: 2>, scalar_prefetch = 0 : i64, scratch_operands = 0 : i64, tpu.core_type = #tpu.core_type<tc>, window_params = [{pipeline_mode = #tpu.pipeline_mode<synchronous>, transform_indices = @transform_0, window_bounds = array<i64: 8, 256>}, {transform_indices = @transform_1, window_bounds = array<i64: 256, 256>}, {transform_indices = @transform_2, window_bounds = array<i64: 1, 256>}, {transform_indices = @transform_3, window_bounds = array<i64: 8, 256>}]} {
    %c0 = arith.constant 0 : index
    %c0_0 = arith.constant 0 : index
    %0 = vector.load %arg1[%c0, %c0_0] : memref<8x256xbf16, #tpu.memory_space<vmem>>, vector<8x256xbf16>
    %c0_1 = arith.constant 0 : index
    %c0_2 = arith.constant 0 : index
    %1 = vector.load %arg2[%c0_1, %c0_2] : memref<256x256xbf16, #tpu.memory_space<vmem>>, vector<256x256xbf16>
    %cst = arith.constant dense<0.000000e+00> : vector<8x256xf32>
    %2 = tpu.matmul %0, %1, %cst {dimension_numbers = #tpu.dot_dimension_numbers<[1], [0], [0], [1], [0, 0, 1, 1], [], []>} : vector<8x256xbf16>, vector<256x256xbf16>, vector<8x256xf32> -> vector<8x256xf32>
    %c0_3 = arith.constant 0 : index
    %c0_4 = arith.constant 0 : index
    %3 = vector.load %arg3[%c0_3, %c0_4] : memref<1x256xf32, #tpu.memory_space<vmem>>, vector<1x256xf32>
    %4 = vector.broadcast %3 : vector<1x256xf32> to vector<8x256xf32>
    %5 = arith.addf %2, %4 : vector<8x256xf32>
    %c0_5 = arith.constant 0 : index
    %c0_6 = arith.constant 0 : index
    %6 = vector.load %arg4[%c0_5, %c0_6] : memref<8x256xf32, #tpu.memory_space<vmem>>, vector<8x256xf32>
    tpu.vector_store %arg4[%c0_5, %c0_6], %5 {strides = array<i32>} : memref<8x256xf32, #tpu.memory_space<vmem>>, vector<8x256xf32>,
    return
  }
  func.func @transform_0(%arg0: i32) -> (i32, i32) {
    %c0_i32 = arith.constant 0 : i32
    %c0_i32_0 = arith.constant 0 : i32
    %c0_i32_1 = arith.constant 0 : i32
    return %c0_i32, %c0_i32_0 : i32, i32
  }
  func.func @transform_1(%arg0: i32) -> (i32, i32) {
    %c0_i32 = arith.constant 0 : i32
    %c0_i32_0 = arith.constant 0 : i32
    return %c0_i32, %arg0 : i32, i32
  }
  func.func @transform_2(%arg0: i32) -> (i32, i32) {
    %c0_i32 = arith.constant 0 : i32
    %c0_i32_0 = arith.constant 0 : i32
    return %c0_i32, %arg0 : i32, i32
  }
  func.func @transform_3(%arg0: i32) -> (i32, i32) {
    %c0_i32 = arith.constant 0 : i32
    %c0_i32_0 = arith.constant 0 : i32
    return %c0_i32, %arg0 : i32, i32
  }
}

</mosaic_0001>

<llo_original>
// kernel: tpu_custom_call.1
$region0: #{tpu_custom_call.1}
  #allocation0 [shape = 'u32[]', space=smem, size = 0x4, offset = 0x4, fixed_abs, tag = 'smem constant byte address 0x4 - core index']
  #allocation1 [shape = 'u32[144,128]{1,0:T(1,128)}', space=vmem, size = 0x12000, scoped, tag = 'internal scratch']
  %s0 = inlined_call_operand.hbm [shape: bf16[8,256], index: 0, kind: input, shape index: {}]
  %s1 = inlined_call_operand.hbm [shape: bf16[256,512], index: 1, kind: input, shape index: {}]
  %s2 = inlined_call_operand.vmem [shape: f32[1,512], index: 2, kind: input, shape index: {}]
  %s3 = inlined_call_operand.hbm [shape: f32[8,512], index: 3, kind: output, shape index: {}]
  %s4 = sld [smem:[#allocation0]]
  $region53: #{tpu_custom_call.1} parent=0
    _
  %s6 = ssub.s32 1, %s4
  %s7 = scalar_select 0, %s6, %s4
  $region1: #{tpu_custom_call.1} parent=0
    #allocation2 [shape = 'u8[4096]{0}', space=vmem, size = 0x1000, scoped, tag = 'input window, operand 0, single buffered']
    #allocation3 [shape = 's32[2]{0}', space=sflag, size = 0x8, scoped, tag = 'scoped memory for tpu_custom_call.1']
    #allocation4 [shape = 's32[2]{0}', space=sflag, size = 0x8, scoped, tag = 'scoped memory for tpu_custom_call.1']
    #allocation5 [shape = 'u8[262144]{0}', space=vmem, size = 0x40000, scoped, tag = 'input window, operand 1']
    #allocation6 [shape = 's32[2]{0}', space=sflag, size = 0x8, scoped, tag = 'scoped memory for tpu_custom_call.1']
    #allocation7 [shape = 'u8[16384]{0}', space=vmem, size = 0x4000, scoped, tag = 'output window, operand 0']
    %8 = vsyncpa [#allocation3], 0
    %9 = vsyncpa [#allocation6], 0
    %s10 = scalar_lea.sflag [#allocation6], 1
    %11 = vsyncpa %s10, 0
    %12 = vsyncpa [#allocation4], 0
    %s13 = scalar_lea.sflag [#allocation4], 1
    %14 = vsyncpa %s13, 0
    loop: start=0, step=1, limit=4
    $region2: #{tpu_custom_call.1} parent=1 // loop_pre_header
      _
    $region3: #{tpu_custom_call.1} parent=1 // loop_header
      %s16 = sphi 0, %s20
      %p17 = scmp.ge.s32.totalorder %s16, 4
      %s24 = sphi 0, %s24
      %s26 = sphi 0, %s24
      %s27 = sphi 0, %s26
      %s41 = sphi 0, %s27
      %s47 = sphi 0, %s49
      %s50 = sphi 0, %s47
      %s51 = sphi 0, %s50
      %s67 = sphi 0, %s51
      %s73 = sphi 0, %s75
      %s76 = sphi 0, %s73
      %s77 = sphi 0, %s76
      %s93 = sphi 0, %s77
      %s99 = sphi 0, %s101
      %s102 = sphi 0, %s99
      %s103 = sphi 0, %s102
      %s119 = sphi 0, %s103
    $region4: #{tpu_custom_call.1} parent=1 // loop_header_branch
      %19 = sbr.rel (%p17) target = $region8
    $region5: #{tpu_custom_call.1} parent=1 // loop_body
      %s21 = ssub.s32 %s16, 1
      %s22 = ssub.s32 %s16, 2
      %s23 = sadd.s32 %s16, 1
      %s25 = sadd.s32 %s24, 1
      %p28 = scmp.eq.s32.totalorder %s16, 1
      %p29 = scmp.ne.s32.totalorder %s24, %s26
      %p30 = scmp.eq.s32.totalorder %s16, 0
      %p31 = por %p29, %p30
      %p32 = scmp.ne.s32.totalorder %s24, %s26
      %p33 = scmp.eq.s32.totalorder %s21, 1
      %p34 = por %p32, %p33
      %p35 = scmp.ne.s32.totalorder %s26, %s27
      %p36 = scmp.eq.s32.totalorder %s21, 0
      %p37 = por %p35, %p36
      %p38 = scmp.ne.s32.totalorder %s26, %s27
      %p39 = scmp.eq.s32.totalorder %s22, 1
      %p40 = por %p38, %p39
      %p42 = scmp.ne.s32.totalorder %s27, %s41
      %p43 = scmp.eq.s32.totalorder %s22, 0
      %p44 = por %p42, %p43
      %s45 = ssub.s32 %s16, %s23
      %p46 = scmp.eq.s32.totalorder %s45, 0
      %s48 = sadd.s32 %s47, 1
      %s49 = scalar_select %p46, %s47, %s48
      %p52 = pneg %p46
      %p53 = scmp.eq.s32.totalorder %s16, 1
      %p54 = por %p52, %p53
      %p55 = scmp.ne.s32.totalorder %s47, %s50
      %p56 = scmp.eq.s32.totalorder %s16, 0
      %p57 = por %p55, %p56
      %p58 = scmp.ne.s32.totalorder %s47, %s50
      %p59 = scmp.eq.s32.totalorder %s21, 1
      %p60 = por %p58, %p59
      %p61 = scmp.ne.s32.totalorder %s50, %s51
      %p62 = scmp.eq.s32.totalorder %s21, 0
      %p63 = por %p61, %p62
      %p64 = scmp.ne.s32.totalorder %s50, %s51
      %p65 = scmp.eq.s32.totalorder %s22, 1
      %p66 = por %p64, %p65
      %p68 = scmp.ne.s32.totalorder %s51, %s67
      %p69 = scmp.eq.s32.totalorder %s22, 0
      %p70 = por %p68, %p69
      %s71 = ssub.s32 %s16, %s23
      %p72 = scmp.eq.s32.totalorder %s71, 0
      %s74 = sadd.s32 %s73, 1
      %s75 = scalar_select %p72, %s73, %s74
      %p78 = pneg %p72
      %p79 = scmp.eq.s32.totalorder %s16, 1
      %p80 = por %p78, %p79
      %p81 = scmp.ne.s32.totalorder %s73, %s76
      %p82 = scmp.eq.s32.totalorder %s16, 0
      %p83 = por %p81, %p82
      %p84 = scmp.ne.s32.totalorder %s73, %s76
      %p85 = scmp.eq.s32.totalorder %s21, 1
      %p86 = por %p84, %p85
      %p87 = scmp.ne.s32.totalorder %s76, %s77
      %p88 = scmp.eq.s32.totalorder %s21, 0
      %p89 = por %p87, %p88
      %p90 = scmp.ne.s32.totalorder %s76, %s77
      %p91 = scmp.eq.s32.totalorder %s22, 1
      %p92 = por %p90, %p91
      %p94 = scmp.ne.s32.totalorder %s77, %s93
      %p95 = scmp.eq.s32.totalorder %s22, 0
      %p96 = por %p94, %p95
      %s97 = ssub.s32 %s16, %s23
      %p98 = scmp.eq.s32.totalorder %s97, 0
      %s100 = sadd.s32 %s99, 1
      %s101 = scalar_select %p98, %s99, %s100
      %p104 = pneg %p98
      %p105 = scmp.eq.s32.totalorder %s16, 1
      %p106 = por %p104, %p105
      %p107 = scmp.ne.s32.totalorder %s99, %s102
      %p108 = scmp.eq.s32.totalorder %s16, 0
      %p109 = por %p107, %p108
      %p110 = scmp.ne.s32.totalorder %s99, %s102
      %p111 = scmp.eq.s32.totalorder %s21, 1
      %p112 = por %p110, %p111
      %p113 = scmp.ne.s32.totalorder %s102, %s103
      %p114 = scmp.eq.s32.totalorder %s21, 0
      %p115 = por %p113, %p114
      %p116 = scmp.ne.s32.totalorder %s102, %s103
      %p117 = scmp.eq.s32.totalorder %s22, 1
      %p118 = por %p116, %p117
      %p120 = scmp.ne.s32.totalorder %s103, %s119
      %p121 = scmp.eq.s32.totalorder %s22, 0
      %p122 = por %p120, %p121
      %p123 = scmp.le.s32.totalorder 1, %s16
      %p124 = scmp.lt.s32.totalorder %s16, 3
      %p125 = pnand %p123, %p124
      %p126 = pneg %p125
      // Predicated region
      $region9: #{tpu_custom_call.1} parent=5 // pred_check
        _
      $region10: #{tpu_custom_call.1} parent=5 // pred_check_branch
        %128 = sbr.rel (%p125) target = $region12
      $region11: #{tpu_custom_call.1} parent=5 // pred_region
        %s129 = ssub.s32 %s16, 1
        // Predicated region
        $region13: #{tpu_custom_call.1} parent=11 // pred_check
          %p130 = pneg %p37
        $region14: #{tpu_custom_call.1} parent=11 // pred_check_branch
          %132 = sbr.rel (%p130) target = $region16
        $region15: #{tpu_custom_call.1} parent=11 // pred_region
          %s134 = ssub.s32 128, 128
          %135 = vsyncadd [#allocation3], %s134
          %s137 = sshll.u32 [#allocation2], 4
          %s138 = int_to_ptr.vmem [resolvable:$true] %s137
          %140 = dma.hbm_to_vmem [thread:$0]  %s0, 128, %s138, [#allocation3]
        $region16: #{tpu_custom_call.1} parent=11 // pred_fallthru
          _
      $region12: #{tpu_custom_call.1} parent=5 // pred_fallthru
        _
      %p141 = scmp.lt.s32.totalorder %s16, 2
      // Predicated region
      $region17: #{tpu_custom_call.1} parent=5 // pred_check
        %p142 = pneg %p141
      $region18: #{tpu_custom_call.1} parent=5 // pred_check_branch
        %144 = sbr.rel (%p142) target = $region20
      $region19: #{tpu_custom_call.1} parent=5 // pred_region
        // Predicated region
        $region21: #{tpu_custom_call.1} parent=19 // pred_check
          %p145 = pneg %p57
        $region22: #{tpu_custom_call.1} parent=19 // pred_check_branch
          %147 = sbr.rel (%p145) target = $region24
        $region23: #{tpu_custom_call.1} parent=19 // pred_region
          %s148 = sand.u32 %s47, 1
          %s149 = scalar_lea.sflag [#allocation6], %s148
          %s150 = sand.u32 %s47, 1
          %s151 = smul.addr %s150, 256
          %s152 = scalar_lea.vmem [#allocation5], %s151
          %s153 = smul.u32 2, %s16
          %s155 = ssub.s32 4096, 4096
          %156 = vsyncadd %s149, %s155
          %s157 = smul.addr %s153, 64
          %s158 = scalar_lea.hbm %s1, %s157
          %s159 = sshll.u32 %s152, 4
          %s160 = int_to_ptr.vmem [resolvable:$true] %s159
          %165 = dma.hbm_to_vmem [thread:$0]  %s158, 4096, %s160, %s149, 256, 128, 8
        $region24: #{tpu_custom_call.1} parent=19 // pred_fallthru
          _
        // Predicated region
        $region25: #{tpu_custom_call.1} parent=19 // pred_check
          %p166 = pneg %p83
        $region26: #{tpu_custom_call.1} parent=19 // pred_check_branch
          %168 = sbr.rel (%p166) target = $region28
        $region27: #{tpu_custom_call.1} parent=19 // pred_region
          %s169 = smul.u32 2, %s16
          %p170 = scmp.lt.s32.totalorder %s169, 3
          %s171 = scalar_select %p170, %s169, 3
          %s172 = scalar_lea.vmem %s2, %s171
          %s173 = smul.u32 2, %s16
        $region28: #{tpu_custom_call.1} parent=19 // pred_fallthru
          _
      $region20: #{tpu_custom_call.1} parent=5 // pred_fallthru
        _
      %p174 = scmp.le.s32.totalorder 1, %s16
      %p175 = scmp.lt.s32.totalorder %s16, 3
      %p176 = pnand %p174, %p175
      %p177 = pneg %p176
      // Predicated region
      $region29: #{tpu_custom_call.1} parent=5 // pred_check
        _
      $region30: #{tpu_custom_call.1} parent=5 // pred_check_branch
        %179 = sbr.rel (%p176) target = $region32
      $region31: #{tpu_custom_call.1} parent=5 // pred_region
        %s180 = ssub.s32 %s16, 1
        // Predicated region
        $region33: #{tpu_custom_call.1} parent=31 // pred_check
          %p181 = pneg %p37
        $region34: #{tpu_custom_call.1} parent=31 // pred_check_branch
          %183 = sbr.rel (%p181) target = $region36
        $region35: #{tpu_custom_call.1} parent=31 // pred_region
          %184 = dma.done [#allocation3], 128
        $region36: #{tpu_custom_call.1} parent=31 // pred_fallthru
          _
        %s185 = sand.u32 %s50, 1
        %s186 = scalar_lea.sflag [#allocation6], %s185
        %s187 = sand.u32 %s50, 1
        %s188 = smul.addr %s187, 256
        %s189 = scalar_lea.vmem [#allocation5], %s188
        // Predicated region
        $region37: #{tpu_custom_call.1} parent=31 // pred_check
          %p190 = pneg %p63
        $region38: #{tpu_custom_call.1} parent=31 // pred_check_branch
          %192 = sbr.rel (%p190) target = $region40
        $region39: #{tpu_custom_call.1} parent=31 // pred_region
          %193 = dma.done %s186, 4096
        $region40: #{tpu_custom_call.1} parent=31 // pred_fallthru
          _
        %p194 = pneg %p37
        %p195 = pneg %p34
        %s196 = sand.u32 %s50, 1
        %s197 = scalar_lea.sflag [#allocation6], %s196
        %s198 = sand.u32 %s50, 1
        %s199 = smul.addr %s198, 256
        %s200 = scalar_lea.vmem [#allocation5], %s199
        %p201 = pneg %p63
        %p202 = pneg %p60
        %s203 = smul.u32 2, %s21
        %p204 = scmp.lt.s32.totalorder %s203, 3
        %s205 = scalar_select %p204, %s203, 3
        %s206 = scalar_lea.vmem %s2, %s205
        %p207 = pneg %p89
        %p208 = pneg %p86
        %p209 = pneg %p115
        %p210 = pneg %p112
        %s211 = sand.u32 %s102, 1
        %s212 = scalar_lea.sflag [#allocation4], %s211
        %s213 = sand.u32 %s102, 1
        %s214 = smul.addr %s213, 16
        %s215 = scalar_lea.vmem [#allocation7], %s214
        %s216 = smul.u32 2, %s21
        %s217 = smul.u32 2, %s21
        %p218 = scmp.lt.s32.totalorder %s217, 3
        %s219 = scalar_select %p218, %s217, 3
        %s220 = scalar_lea.vmem %s2, %s219
        %s221 = smul.u32 2, %s21
        %s222 = smul.u32 2, %s21
        %v223 = vld [vmem:[#allocation2] sm:$0xff]
        %v224 = vld [vmem:[%s189] sm:$0xff]
        %v225 = vld [vmem:[%s189 + $0x8] sm:$0xff]
        %v226 = vld [vmem:[%s189 + $0x10] sm:$0xff]
        %v227 = vld [vmem:[%s189 + $0x18] sm:$0xff]
        %v228 = vld [vmem:[%s189 + $0x20] sm:$0xff]
        %v229 = vld [vmem:[%s189 + $0x28] sm:$0xff]
        %v230 = vld [vmem:[%s189 + $0x30] sm:$0xff]
        %v231 = vld [vmem:[%s189 + $0x38] sm:$0xff]
        %v232 = vld [vmem:[%s189 + $0x40] sm:$0xff]
        %v233 = vld [vmem:[%s189 + $0x48] sm:$0xff]
        %v234 = vld [vmem:[%s189 + $0x50] sm:$0xff]
        %v235 = vld [vmem:[%s189 + $0x58] sm:$0xff]
        %v236 = vld [vmem:[%s189 + $0x60] sm:$0xff]
        %v237 = vld [vmem:[%s189 + $0x68] sm:$0xff]
        %v238 = vld [vmem:[%s189 + $0x70] sm:$0xff]
        %v239 = vld [vmem:[%s189 + $0x78] sm:$0xff]
        %v240 = vld [vmem:[%s189 + $0x80] sm:$0xff]
        %v241 = vld [vmem:[%s189 + $0x88] sm:$0xff]
        %v242 = vld [vmem:[%s189 + $0x90] sm:$0xff]
        %v243 = vld [vmem:[%s189 + $0x98] sm:$0xff]
        %v244 = vld [vmem:[%s189 + $0xa0] sm:$0xff]
        %v245 = vld [vmem:[%s189 + $0xa8] sm:$0xff]
        %v246 = vld [vmem:[%s189 + $0xb0] sm:$0xff]
        %v247 = vld [vmem:[%s189 + $0xb8] sm:$0xff]
        %v248 = vld [vmem:[%s189 + $0xc0] sm:$0xff]
        %v249 = vld [vmem:[%s189 + $0xc8] sm:$0xff]
        %v250 = vld [vmem:[%s189 + $0xd0] sm:$0xff]
        %v251 = vld [vmem:[%s189 + $0xd8] sm:$0xff]
        %v252 = vld [vmem:[%s189 + $0xe0] sm:$0xff]
        %v253 = vld [vmem:[%s189 + $0xe8] sm:$0xff]
        %v254 = vld [vmem:[%s189 + $0xf0] sm:$0xff]
        %v255 = vld [vmem:[%s189 + $0xf8] sm:$0xff]
        %v256 = vld [vmem:[%s220] sm:$0x3]
        %v258 = vlaneseq
        %v259 = vshrl.u32 %v258, 7
        %v260 = vsub.s32 0, %v259
        %v261 = vrot.slane %v256, %v260
        %v262 = vlaneseq
        %v263 = vshrl.u32 %v262, 7
        %v264 = vsub.s32 1, %v263
        %v265 = vrot.slane %v256, %v264
        %v269 = vunpack.c.l.b16 %v223
        %v270 = vunpack.c.h.b16 %v223
        %v271 = vpack.c.b16 %v269, %v269
        %v272 = vpack.c.b16 %v270, %v270
        %v307 = vunpack.c.l.b16 %v224
        %v308 = vunpack.c.h.b16 %v224
        %v309 = vunpack.c.l.b16 %v225
        %v310 = vunpack.c.h.b16 %v225
        %v311 = vunpack.c.l.b16 %v226
        %v312 = vunpack.c.h.b16 %v226
        %v313 = vunpack.c.l.b16 %v227
        %v314 = vunpack.c.h.b16 %v227
        %v315 = vunpack.c.l.b16 %v228
        %v316 = vunpack.c.h.b16 %v228
        %v317 = vunpack.c.l.b16 %v229
        %v318 = vunpack.c.h.b16 %v229
        %v319 = vunpack.c.l.b16 %v230
        %v320 = vunpack.c.h.b16 %v230
        %v321 = vunpack.c.l.b16 %v231
        %v322 = vunpack.c.h.b16 %v231
        %v323 = vunpack.c.l.b16 %v232
        %v324 = vunpack.c.h.b16 %v232
        %v325 = vunpack.c.l.b16 %v233
        %v326 = vunpack.c.h.b16 %v233
        %v327 = vunpack.c.l.b16 %v234
        %v328 = vunpack.c.h.b16 %v234
        %v329 = vunpack.c.l.b16 %v235
        %v330 = vunpack.c.h.b16 %v235
        %v331 = vunpack.c.l.b16 %v236
        %v332 = vunpack.c.h.b16 %v236
        %v333 = vunpack.c.l.b16 %v237
        %v334 = vunpack.c.h.b16 %v237
        %v335 = vunpack.c.l.b16 %v238
        %v336 = vunpack.c.h.b16 %v238
        %v337 = vunpack.c.l.b16 %v239
        %v338 = vunpack.c.h.b16 %v239
        %v339 = vunpack.c.l.b16 %v240
        %v340 = vunpack.c.h.b16 %v240
        %v341 = vunpack.c.l.b16 %v241
        %v342 = vunpack.c.h.b16 %v241
        %v343 = vunpack.c.l.b16 %v242
        %v344 = vunpack.c.h.b16 %v242
        %v345 = vunpack.c.l.b16 %v243
        %v346 = vunpack.c.h.b16 %v243
        %v347 = vunpack.c.l.b16 %v244
        %v348 = vunpack.c.h.b16 %v244
        %v349 = vunpack.c.l.b16 %v245
        %v350 = vunpack.c.h.b16 %v245
        %v351 = vunpack.c.l.b16 %v246
        %v352 = vunpack.c.h.b16 %v246
        %v353 = vunpack.c.l.b16 %v247
        %v354 = vunpack.c.h.b16 %v247
        %v355 = vunpack.c.l.b16 %v248
        %v356 = vunpack.c.h.b16 %v248
        %v357 = vunpack.c.l.b16 %v249
        %v358 = vunpack.c.h.b16 %v249
        %v359 = vunpack.c.l.b16 %v250
        %v360 = vunpack.c.h.b16 %v250
        %v361 = vunpack.c.l.b16 %v251
        %v362 = vunpack.c.h.b16 %v251
        %v363 = vunpack.c.l.b16 %v252
        %v364 = vunpack.c.h.b16 %v252
        %v365 = vunpack.c.l.b16 %v253
        %v366 = vunpack.c.h.b16 %v253
        %v367 = vunpack.c.l.b16 %v254
        %v368 = vunpack.c.h.b16 %v254
        %v369 = vunpack.c.l.b16 %v255
        %v370 = vunpack.c.h.b16 %v255
        %v371 = vpack.c.b16 %v309, %v307
        %v372 = vpack.c.b16 %v310, %v308
        %v373 = vpack.c.b16 %v313, %v311
        %v374 = vpack.c.b16 %v314, %v312
        %v375 = vpack.c.b16 %v317, %v315
        %v376 = vpack.c.b16 %v318, %v316
        %v377 = vpack.c.b16 %v321, %v319
        %v378 = vpack.c.b16 %v322, %v320
        %v379 = vpack.c.b16 %v325, %v323
        %v380 = vpack.c.b16 %v326, %v324
        %v381 = vpack.c.b16 %v329, %v327
        %v382 = vpack.c.b16 %v330, %v328
        %v383 = vpack.c.b16 %v333, %v331
        %v384 = vpack.c.b16 %v334, %v332
        %v385 = vpack.c.b16 %v337, %v335
        %v386 = vpack.c.b16 %v338, %v336
        %v387 = vpack.c.b16 %v341, %v339
        %v388 = vpack.c.b16 %v342, %v340
        %v389 = vpack.c.b16 %v345, %v343
        %v390 = vpack.c.b16 %v346, %v344
        %v391 = vpack.c.b16 %v349, %v347
        %v392 = vpack.c.b16 %v350, %v348
        %v393 = vpack.c.b16 %v353, %v351
        %v394 = vpack.c.b16 %v354, %v352
        %v395 = vpack.c.b16 %v357, %v355
        %v396 = vpack.c.b16 %v358, %v356
        %v397 = vpack.c.b16 %v361, %v359
        %v398 = vpack.c.b16 %v362, %v360
        %v399 = vpack.c.b16 %v365, %v363
        %v400 = vpack.c.b16 %v366, %v364
        %v401 = vpack.c.b16 %v369, %v367
        %v402 = vpack.c.b16 %v370, %v368
        %435 = vmatprep.subr.bf16.mxu0 %v372
        %436 = vmatpush1.bf16.msra.mxu0 %v371
        %437 = vmatprep.subr.bf16.mxu0 %v374
        %438 = vmatpush1.bf16.msra.mxu0 %v373
        %439 = vmatprep.subr.bf16.mxu0 %v376
        %440 = vmatpush1.bf16.msra.mxu0 %v375
        %441 = vmatprep.subr.bf16.mxu0 %v378
        %442 = vmatpush1.bf16.msra.mxu0 %v377
        %443 = vmatprep.subr.bf16.mxu0 %v380
        %444 = vmatpush1.bf16.msra.mxu0 %v379
        %445 = vmatprep.subr.bf16.mxu0 %v382
        %446 = vmatpush1.bf16.msra.mxu0 %v381
        %447 = vmatprep.subr.bf16.mxu0 %v384
        %448 = vmatpush1.bf16.msra.mxu0 %v383
        %449 = vmatprep.subr.bf16.mxu0 %v386
        %450 = vmatpush1.bf16.msra.mxu0 %v385
        %451 = vmatprep.subr.bf16.mxu0 %v388
        %452 = vmatpush1.bf16.msra.mxu0 %v387
        %453 = vmatprep.subr.bf16.mxu0 %v390
        %454 = vmatpush1.bf16.msra.mxu0 %v389
        %455 = vmatprep.subr.bf16.mxu0 %v392
        %456 = vmatpush1.bf16.msra.mxu0 %v391
        %457 = vmatprep.subr.bf16.mxu0 %v394
        %458 = vmatpush1.bf16.msra.mxu0 %v393
        %459 = vmatprep.subr.bf16.mxu0 %v396
        %460 = vmatpush1.bf16.msra.mxu0 %v395
        %461 = vmatprep.subr.bf16.mxu0 %v398
        %462 = vmatpush1.bf16.msra.mxu0 %v397
        %463 = vmatprep.subr.bf16.mxu0 %v400
        %464 = vmatpush1.bf16.msra.mxu0 %v399
        %465 = vmatprep.subr.bf16.mxu0 %v402
        %466 = vmatpush1.bf16.msra.mxu0 %v401
        %467 = vmatprep.mubr.bf16.mxu0 %v272
        %468 = vmatmul.mubr.bf16.gmra.mrb[0].mxu0 %v271
        %v469 = vpop.f32.mrb[0].mxu0
        %v470 = vadd.f32 %v261, %v469
        %v471 = vpop.f32.mrb[0].mxu0
        %v472 = vadd.f32 %v265, %v471
        %v473 = vpop.f32.mrb[0].mxu0
        %v474 = vpop.f32.mrb[0].mxu0
        %475 = vdwg.mxu0
        %476 = vst [vmem:[%s215] sm:$0xff] %v470
        %477 = vst [vmem:[%s215 + $0x8] sm:$0xff] %v472
        %s478 = sand.u32 %s102, 1
        %s479 = scalar_lea.sflag [#allocation4], %s478
        %s480 = sand.u32 %s102, 1
        %s481 = smul.addr %s480, 16
        %s482 = scalar_lea.vmem [#allocation7], %s481
        // Predicated region
        $region41: #{tpu_custom_call.1} parent=31 // pred_check
          %p483 = pneg %p112
        $region42: #{tpu_custom_call.1} parent=31 // pred_check_branch
          %485 = sbr.rel (%p483) target = $region44
        $region43: #{tpu_custom_call.1} parent=31 // pred_region
          %s486 = smul.u32 2, %s21
          %s488 = ssub.s32 256, 256
          %489 = vsyncadd %s479, %s488
          %s490 = smul.addr %s486, 128
          %s491 = scalar_lea.hbm %s3, %s490
          %s493 = sshll.u32 %s482, 4
          %s494 = int_to_ptr.vmem [resolvable:$true] %s493
          %496 = dma.vmem_to_hbm [thread:$0]  %s494, 256, %s491, %s479
        $region44: #{tpu_custom_call.1} parent=31 // pred_fallthru
          _
      $region32: #{tpu_custom_call.1} parent=5 // pred_fallthru
        _
      %p497 = scmp.le.s32.totalorder 2, %s16
      // Predicated region
      $region45: #{tpu_custom_call.1} parent=5 // pred_check
        %p498 = pneg %p497
      $region46: #{tpu_custom_call.1} parent=5 // pred_check_branch
        %500 = sbr.rel (%p498) target = $region48
      $region47: #{tpu_custom_call.1} parent=5 // pred_region
        %s501 = ssub.s32 %s16, 2
        // Predicated region
        $region49: #{tpu_custom_call.1} parent=47 // pred_check
          %p502 = pneg %p118
        $region50: #{tpu_custom_call.1} parent=47 // pred_check_branch
          %504 = sbr.rel (%p502) target = $region52
        $region51: #{tpu_custom_call.1} parent=47 // pred_region
          %s505 = sand.u32 %s103, 1
          %s506 = scalar_lea.sflag [#allocation4], %s505
          %s507 = sand.u32 %s103, 1
          %s508 = smul.addr %s507, 16
          %s509 = scalar_lea.vmem [#allocation7], %s508
          %510 = dma.done %s506, 256
        $region52: #{tpu_custom_call.1} parent=47 // pred_fallthru
          _
      $region48: #{tpu_custom_call.1} parent=5 // pred_fallthru
        _
    $region6: #{tpu_custom_call.1} parent=1 // loop_footer
      %s20 = sadd.s32 1, %s16
    $region7: #{tpu_custom_call.1} parent=1 // loop_footer_branch
      %15 = sbr.rel target = $region3
    $region8: #{tpu_custom_call.1} parent=1 // loop_exit
      _
    %511 = vsyncpa [#allocation3], 1
    %s512 = scalar_lea.sflag [#allocation3], 1
    %513 = vsyncpa %s512, 1
    %514 = vsyncpa [#allocation6], 1
    %s515 = scalar_lea.sflag [#allocation6], 1
    %516 = vsyncpa %s515, 1
    %517 = vsyncpa [#allocation4], 1
    %s518 = scalar_lea.sflag [#allocation4], 1
    %519 = vsyncpa %s518, 1

</llo_original>
